<compile_context>
chip_gen: v5e
topology: v5e:2x2
jax: 0.10.0
libtpu: 0.0.40
codegen_flags: <defaults>
</compile_context>

<pallas_src>
import functools

import jax
import jax.numpy as jnp
from jax.experimental import pallas as pl
from jax.experimental.pallas import tpu as pltpu

_SUBLANE = 8      # sublane granularity for the batch (second-minor) axis
_TB_MAX = 1024    # max batch tile (VMEM footprint is tiny even at this size)


def _round_up(n, m):
    return ((n + m - 1) // m) * m


def _maybe_cast(a, dtype):
    a = jnp.asarray(a)
    return a if a.dtype == dtype else a.astype(dtype)


def _largest_div_tile(b_p, cap):
    """Largest multiple-of-8 divisor of b_p that is <= cap (b_p multiple of 8)."""
    best = _SUBLANE
    m = b_p // _SUBLANE
    d = 1
    while d * _SUBLANE <= cap and d <= m:
        if m % d == 0:
            best = d * _SUBLANE
        d += 1
    return best


def _qnetwork_kernel(x_ref, w1_ref, b1_ref, w2_ref, b2_ref, w3_ref, b3_ref,
                     out_ref, *, dot_dtype):
    """Fused forward for one (tb, S) batch tile: relu(x@W1+b1) -> relu(.@W2+b2) -> .@W3+b3.

    Dot inputs are cast to `dot_dtype`; accumulation is f32 (preferred_element_type)
    and all elementwise math (bias add, ReLU) stays f32 (v5e VPU has no bf16).
    """
    x = x_ref[...]
    h1 = jnp.dot(x.astype(dot_dtype), w1_ref[...],
                 preferred_element_type=jnp.float32) + b1_ref[...]
    h1 = jnp.maximum(h1, 0.0)
    h2 = jnp.dot(h1.astype(dot_dtype), w2_ref[...],
                 preferred_element_type=jnp.float32) + b2_ref[...]
    h2 = jnp.maximum(h2, 0.0)
    out = jnp.dot(h2.astype(dot_dtype), w3_ref[...],
                  preferred_element_type=jnp.float32) + b3_ref[...]
    out_ref[...] = out.astype(out_ref.dtype)


def qnetwork_forward(x, params, *, weights_dtype=jnp.bfloat16, tb_max=_TB_MAX):
    """Run the fused QNetwork kernel.

    x:       [B, state_size] float32 (or bfloat16)
    params:  dict with w1 [S,H1], b1 [1,H1], w2 [H1,H2], b2 [1,H2], w3 [H2,A], b3 [1,A]
             (weights are [in_features, out_features], i.e. transposed vs. nn.Linear)
    returns: [B, action_size] float32
    """
    w1 = _maybe_cast(params["w1"], weights_dtype)
    w2 = _maybe_cast(params["w2"], weights_dtype)
    w3 = _maybe_cast(params["w3"], weights_dtype)
    b1 = _maybe_cast(jnp.asarray(params["b1"]).reshape(1, -1), jnp.float32)
    b2 = _maybe_cast(jnp.asarray(params["b2"]).reshape(1, -1), jnp.float32)
    b3 = _maybe_cast(jnp.asarray(params["b3"]).reshape(1, -1), jnp.float32)

    S, H1 = w1.shape
    H2 = w2.shape[1]
    A = w3.shape[1]
    B = x.shape[0]

    # --- batch tiling -------------------------------------------------------
    b_p = _round_up(B, _SUBLANE)
    tb_cap = min(tb_max, b_p)
    if b_p > _SUBLANE and tb_cap == b_p:
        # Whole batch would be one grid step; split in two so both TensorCores
        # on v7x get work via the "parallel" batch axis.
        tb_cap = _round_up(pl.cdiv(b_p, 2), _SUBLANE)
    tb = _largest_div_tile(b_p, tb_cap)
    if 4 * tb >= tb_cap:
        b_pad = b_p                      # tb divides b_p: no extra batch padding
    else:
        tb = tb_cap                      # pathological divisors: pad a little instead
        b_pad = _round_up(b_p, tb)
    grid = (b_pad // tb,)

    # Conditional batch pad only (no feature padding anywhere).
    x_in = x if b_pad == B else jnp.pad(x, ((0, b_pad - B), (0, 0)))

    kernel = functools.partial(_qnetwork_kernel, dot_dtype=weights_dtype)

    # Weights/biases: full-array blocks pinned at block index (0,0) -> VMEM-resident,
    # not re-fetched per grid step.
    const = lambda arr: pl.BlockSpec(arr.shape, lambda i: (0, 0))

    itemsize = lambda a: jnp.dtype(a.dtype).itemsize
    flops = 2 * b_pad * (S * H1 + H1 * H2 + H2 * A)
    bytes_accessed = (
        b_pad * S * itemsize(x_in)
        + sum(int(a.size) * itemsize(a) for a in (w1, b1, w2, b2, w3, b3))
        + b_pad * A * 4
    )
    cost = pl.CostEstimate(flops=flops, transcendentals=0,
                           bytes_accessed=bytes_accessed)

    out = pl.pallas_call(
        kernel,
        out_shape=jax.ShapeDtypeStruct((b_pad, A), jnp.float32),
        grid=grid,
        in_specs=[
            pl.BlockSpec((tb, S), lambda i: (i, 0)),   # x: tiled over batch only
            const(w1), const(b1),
            const(w2), const(b2),
            const(w3), const(b3),
        ],
        out_specs=pl.BlockSpec((tb, A), lambda i: (i, 0)),
        compiler_params=pltpu.CompilerParams(
            dimension_semantics=("parallel",),
        ),
        cost_estimate=cost,
    )(x_in, w1, b1, w2, b2, w3, b3)

    return out if b_pad == B else out[:B]


def init_qnetwork_params(key, state_size, action_size, fc1_units=64, fc2_units=64):
    """Deterministic init mimicking PyTorch nn.Linear default: U(-1/sqrt(fan_in), 1/sqrt(fan_in))."""
    keys = jax.random.split(key, 6)

    def linear(kw, kb, fan_in, fan_out):
        bound = 1.0 / jnp.sqrt(jnp.float32(fan_in))
        w = jax.random.uniform(kw, (fan_in, fan_out), jnp.float32, -bound, bound)
        b = jax.random.uniform(kb, (1, fan_out), jnp.float32, -bound, bound)
        return w, b

    w1, b1 = linear(keys[0], keys[1], state_size, fc1_units)
    w2, b2 = linear(keys[2], keys[3], fc1_units, fc2_units)
    w3, b3 = linear(keys[4], keys[5], fc2_units, action_size)
    return {"w1": w1, "b1": b1, "w2": w2, "b2": b2, "w3": w3, "b3": b3}


def qnetwork_reference(x, p):
    """Pure-JAX reference for correctness check."""
    h1 = jnp.maximum(x @ p["w1"] + p["b1"], 0.0)
    h2 = jnp.maximum(h1 @ p["w2"] + p["b2"], 0.0)
    return h2 @ p["w3"] + p["b3"]


if __name__ == "__main__":
    state_size = 16
    action_size = 4
    batch = 8

    key = jax.random.PRNGKey(0)
    k_params, k_x = jax.random.split(key)

    params = init_qnetwork_params(k_params, state_size, action_size,
                                  fc1_units=64, fc2_units=64)
    x = jax.random.normal(k_x, (batch, state_size), jnp.float32)

    # f32 dot path: exact check against the f32 reference.
    out = qnetwork_forward(x, params, weights_dtype=jnp.float32)
    out = jax.block_until_ready(out)

    ref = qnetwork_reference(x, params)
    assert out.shape == (batch, action_size)
    assert jnp.allclose(out, ref, atol=1e-5, rtol=1e-5), "mismatch vs reference"

    # Default (bf16 dots, f32 accumulate) path; looser tolerance.
    out_bf16 = jax.block_until_ready(qnetwork_forward(x, params))
    assert out_bf16.shape == (batch, action_size)
    assert jnp.allclose(out_bf16, ref, atol=3e-2, rtol=3e-2), "bf16 path mismatch"

    print("KERNEL_OK")
</pallas_src>

<mosaic_0001>
module attributes {stable_mosaic.version = 11 : i64} {
  func.func @_qnetwork_kernel(%arg0: i32, %arg1: memref<8x16xf32, #tpu.memory_space<vmem>>, %arg2: memref<16x64xf32, #tpu.memory_space<vmem>>, %arg3: memref<1x64xf32, #tpu.memory_space<vmem>>, %arg4: memref<64x64xf32, #tpu.memory_space<vmem>>, %arg5: memref<1x64xf32, #tpu.memory_space<vmem>>, %arg6: memref<64x4xf32, #tpu.memory_space<vmem>>, %arg7: memref<1x4xf32, #tpu.memory_space<vmem>>, %arg8: memref<8x4xf32, #tpu.memory_space<vmem>>) attributes {dimension_semantics = [#tpu.dimension_semantics<parallel>], iteration_bounds = array<i64: 1>, scalar_prefetch = 0 : i64, scratch_operands = 0 : i64, tpu.core_type = #tpu.core_type<tc>, window_params = [{transform_indices = @transform_0, window_bounds = array<i64: 8, 16>}, {pipeline_mode = #tpu.pipeline_mode<synchronous>, transform_indices = @transform_1, window_bounds = array<i64: 16, 64>}, {pipeline_mode = #tpu.pipeline_mode<synchronous>, transform_indices = @transform_2, window_bounds = array<i64: 1, 64>}, {pipeline_mode = #tpu.pipeline_mode<synchronous>, transform_indices = @transform_3, window_bounds = array<i64: 64, 64>}, {pipeline_mode = #tpu.pipeline_mode<synchronous>, transform_indices = @transform_4, window_bounds = array<i64: 1, 64>}, {pipeline_mode = #tpu.pipeline_mode<synchronous>, transform_indices = @transform_5, window_bounds = array<i64: 64, 4>}, {pipeline_mode = #tpu.pipeline_mode<synchronous>, transform_indices = @transform_6, window_bounds = array<i64: 1, 4>}, {transform_indices = @transform_7, window_bounds = array<i64: 8, 4>}]} {
    %c0 = arith.constant 0 : index
    %c0_0 = arith.constant 0 : index
    %0 = vector.load %arg1[%c0, %c0_0] : memref<8x16xf32, #tpu.memory_space<vmem>>, vector<8x16xf32>
    %c0_1 = arith.constant 0 : index
    %c0_2 = arith.constant 0 : index
    %1 = vector.load %arg2[%c0_1, %c0_2] : memref<16x64xf32, #tpu.memory_space<vmem>>, vector<16x64xf32>
    %cst = arith.constant dense<0.000000e+00> : vector<8x64xf32>
    %2 = tpu.matmul %0, %1, %cst {dimension_numbers = #tpu.dot_dimension_numbers<[1], [0], [0], [1], [0, 0, 1, 1], [], []>} : vector<8x16xf32>, vector<16x64xf32>, vector<8x64xf32> -> vector<8x64xf32>
    %c0_3 = arith.constant 0 : index
    %c0_4 = arith.constant 0 : index
    %3 = vector.load %arg3[%c0_3, %c0_4] : memref<1x64xf32, #tpu.memory_space<vmem>>, vector<1x64xf32>
    %4 = vector.broadcast %3 : vector<1x64xf32> to vector<8x64xf32>
    %5 = arith.addf %2, %4 : vector<8x64xf32>
    %cst_5 = arith.constant 0.000000e+00 : f32
    %6 = vector.broadcast %cst_5 : f32 to vector<8x64xf32>
    %7 = arith.maximumf %5, %6 : vector<8x64xf32>
    %c0_6 = arith.constant 0 : index
    %c0_7 = arith.constant 0 : index
    %8 = vector.load %arg4[%c0_6, %c0_7] : memref<64x64xf32, #tpu.memory_space<vmem>>, vector<64x64xf32>
    %cst_8 = arith.constant dense<0.000000e+00> : vector<8x64xf32>
    %9 = tpu.matmul %7, %8, %cst_8 {dimension_numbers = #tpu.dot_dimension_numbers<[1], [0], [0], [1], [0, 0, 1, 1], [], []>} : vector<8x64xf32>, vector<64x64xf32>, vector<8x64xf32> -> vector<8x64xf32>
    %c0_9 = arith.constant 0 : index
    %c0_10 = arith.constant 0 : index
    %10 = vector.load %arg5[%c0_9, %c0_10] : memref<1x64xf32, #tpu.memory_space<vmem>>, vector<1x64xf32>
    %11 = vector.broadcast %10 : vector<1x64xf32> to vector<8x64xf32>
    %12 = arith.addf %9, %11 : vector<8x64xf32>
    %cst_11 = arith.constant 0.000000e+00 : f32
    %13 = vector.broadcast %cst_11 : f32 to vector<8x64xf32>
    %14 = arith.maximumf %12, %13 : vector<8x64xf32>
    %c0_12 = arith.constant 0 : index
    %c0_13 = arith.constant 0 : index
    %15 = vector.load %arg6[%c0_12, %c0_13] : memref<64x4xf32, #tpu.memory_space<vmem>>, vector<64x4xf32>
    %cst_14 = arith.constant dense<0.000000e+00> : vector<8x4xf32>
    %16 = tpu.matmul %14, %15, %cst_14 {dimension_numbers = #tpu.dot_dimension_numbers<[1], [0], [0], [1], [0, 0, 1, 1], [], []>} : vector<8x64xf32>, vector<64x4xf32>, vector<8x4xf32> -> vector<8x4xf32>
    %c0_15 = arith.constant 0 : index
    %c0_16 = arith.constant 0 : index
    %17 = vector.load %arg7[%c0_15, %c0_16] : memref<1x4xf32, #tpu.memory_space<vmem>>, vector<1x4xf32>
    %18 = vector.broadcast %17 : vector<1x4xf32> to vector<8x4xf32>
    %19 = arith.addf %16, %18 : vector<8x4xf32>
    %c0_17 = arith.constant 0 : index
    %c0_18 = arith.constant 0 : index
    %20 = vector.load %arg8[%c0_17, %c0_18] : memref<8x4xf32, #tpu.memory_space<vmem>>, vector<8x4xf32>
    tpu.vector_store %arg8[%c0_17, %c0_18], %19 {strides = array<i32>} : memref<8x4xf32, #tpu.memory_space<vmem>>, vector<8x4xf32>,
    return
  }
  func.func @transform_0(%arg0: i32) -> (i32, i32) {
    %c0_i32 = arith.constant 0 : i32
    %c0_i32_0 = arith.constant 0 : i32
    return %arg0, %c0_i32 : i32, i32
  }
  func.func @transform_1(%arg0: i32) -> (i32, i32) {
    %c0_i32 = arith.constant 0 : i32
    %c0_i32_0 = arith.constant 0 : i32
    %c0_i32_1 = arith.constant 0 : i32
    return %c0_i32, %c0_i32_0 : i32, i32
  }
  func.func @transform_2(%arg0: i32) -> (i32, i32) {
    %c0_i32 = arith.constant 0 : i32
    %c0_i32_0 = arith.constant 0 : i32
    %c0_i32_1 = arith.constant 0 : i32
    return %c0_i32, %c0_i32_0 : i32, i32
  }
  func.func @transform_3(%arg0: i32) -> (i32, i32) {
    %c0_i32 = arith.constant 0 : i32
    %c0_i32_0 = arith.constant 0 : i32
    %c0_i32_1 = arith.constant 0 : i32
    return %c0_i32, %c0_i32_0 : i32, i32
  }
  func.func @transform_4(%arg0: i32) -> (i32, i32) {
    %c0_i32 = arith.constant 0 : i32
    %c0_i32_0 = arith.constant 0 : i32
    %c0_i32_1 = arith.constant 0 : i32
    return %c0_i32, %c0_i32_0 : i32, i32
  }
  func.func @transform_5(%arg0: i32) -> (i32, i32) {
    %c0_i32 = arith.constant 0 : i32
    %c0_i32_0 = arith.constant 0 : i32
    %c0_i32_1 = arith.constant 0 : i32
    return %c0_i32, %c0_i32_0 : i32, i32
  }
  func.func @transform_6(%arg0: i32) -> (i32, i32) {
    %c0_i32 = arith.constant 0 : i32
    %c0_i32_0 = arith.constant 0 : i32
    %c0_i32_1 = arith.constant 0 : i32
    return %c0_i32, %c0_i32_0 : i32, i32
  }
  func.func @transform_7(%arg0: i32) -> (i32, i32) {
    %c0_i32 = arith.constant 0 : i32
    %c0_i32_0 = arith.constant 0 : i32
    return %arg0, %c0_i32 : i32, i32
  }
}

</mosaic_0001>

<llo_original>
// kernel: tpu_custom_call.1
$region0: #{tpu_custom_call.1}
  #allocation0 [shape = 'u32[]', space=smem, size = 0x4, offset = 0x4, fixed_abs, tag = 'smem constant byte address 0x4 - core index']
  #allocation1 [shape = 'u32[72,128]{1,0:T(1,128)}', space=vmem, size = 0x9000, scoped, tag = 'internal scratch']
  %s0 = inlined_call_operand.hbm [shape: f32[8,16], index: 0, kind: input, shape index: {}]
  %s1 = inlined_call_operand.hbm [shape: f32[16,64], index: 1, kind: input, shape index: {}]
  %s2 = inlined_call_operand.vmem [shape: f32[1,64], index: 2, kind: input, shape index: {}]
  %s3 = inlined_call_operand.vmem [shape: f32[64,64], index: 3, kind: input, shape index: {}]
  %s4 = inlined_call_operand.vmem [shape: f32[1,64], index: 4, kind: input, shape index: {}]
  %s5 = inlined_call_operand.vmem [shape: f32[64,4], index: 5, kind: input, shape index: {}]
  %s6 = inlined_call_operand.vmem [shape: f32[1,4], index: 6, kind: input, shape index: {}]
  %s7 = inlined_call_operand.vmem [shape: f32[8,4], index: 7, kind: output, shape index: {}]
  %s8 = sld [smem:[#allocation0]]
  $region46: #{tpu_custom_call.1} parent=0
    _
  %s10 = ssub.s32 1, %s8
  %s11 = scalar_select 0, %s10, %s8
  $region1: #{tpu_custom_call.1} parent=0
    #allocation2 [shape = 'u8[4096]{0}', space=vmem, size = 0x1000, scoped, tag = 'input window, operand 0, single buffered']
    #allocation3 [shape = 's32[1]{0}', space=sflag, size = 0x4, scoped, tag = 'scoped memory for tpu_custom_call.1']
    #allocation4 [shape = 'u8[8192]{0}', space=vmem, size = 0x2000, scoped, tag = 'input window, operand 1, single buffered']
    #allocation5 [shape = 's32[1]{0}', space=sflag, size = 0x4, scoped, tag = 'scoped memory for tpu_custom_call.1']
    %12 = vsyncpa [#allocation3], 0
    %13 = vsyncpa [#allocation5], 0
    // Predicated region
    $region2: #{tpu_custom_call.1} parent=1 // pred_check
      _
    $region3: #{tpu_custom_call.1} parent=1 // pred_check_branch
      %15 = sbr.rel (0) target = $region5
    $region4: #{tpu_custom_call.1} parent=1 // pred_region
      %17 = vsyncadd [#allocation3], 0
      %s19 = sshll.u32 %s0, 4
      %s20 = int_to_ptr.hbm [resolvable:$true] %s19
      %s21 = sshll.u32 [#allocation2], 4
      %s22 = int_to_ptr.vmem [resolvable:$true] %s21
      %24 = dma.hbm_to_vmem [thread:$0]  %s20, 128, %s22, [#allocation3]
    $region5: #{tpu_custom_call.1} parent=1 // pred_fallthru
      _
    // Predicated region
    $region6: #{tpu_custom_call.1} parent=1 // pred_check
      _
    $region7: #{tpu_custom_call.1} parent=1 // pred_check_branch
      %26 = sbr.rel (0) target = $region9
    $region8: #{tpu_custom_call.1} parent=1 // pred_region
      %28 = vsyncadd [#allocation5], 0
      %s29 = sshll.u32 %s1, 4
      %s30 = int_to_ptr.hbm [resolvable:$true] %s29
      %s31 = sshll.u32 [#allocation4], 4
      %s32 = int_to_ptr.vmem [resolvable:$true] %s31
      %37 = dma.hbm_to_vmem [thread:$0]  %s30, 256, %s32, [#allocation5], 128, 128, 8
    $region9: #{tpu_custom_call.1} parent=1 // pred_fallthru
      _
    // Predicated region
    $region10: #{tpu_custom_call.1} parent=1 // pred_check
      _
    $region11: #{tpu_custom_call.1} parent=1 // pred_check_branch
      %39 = sbr.rel (0) target = $region13
    $region12: #{tpu_custom_call.1} parent=1 // pred_region
      _
    $region13: #{tpu_custom_call.1} parent=1 // pred_fallthru
      _
    // Predicated region
    $region14: #{tpu_custom_call.1} parent=1 // pred_check
      _
    $region15: #{tpu_custom_call.1} parent=1 // pred_check_branch
      %41 = sbr.rel (0) target = $region17
    $region16: #{tpu_custom_call.1} parent=1 // pred_region
      _
    $region17: #{tpu_custom_call.1} parent=1 // pred_fallthru
      _
    // Predicated region
    $region18: #{tpu_custom_call.1} parent=1 // pred_check
      _
    $region19: #{tpu_custom_call.1} parent=1 // pred_check_branch
      %43 = sbr.rel (0) target = $region21
    $region20: #{tpu_custom_call.1} parent=1 // pred_region
      _
    $region21: #{tpu_custom_call.1} parent=1 // pred_fallthru
      _
    // Predicated region
    $region22: #{tpu_custom_call.1} parent=1 // pred_check
      _
    $region23: #{tpu_custom_call.1} parent=1 // pred_check_branch
      %45 = sbr.rel (0) target = $region25
    $region24: #{tpu_custom_call.1} parent=1 // pred_region
      _
    $region25: #{tpu_custom_call.1} parent=1 // pred_fallthru
      _
    // Predicated region
    $region26: #{tpu_custom_call.1} parent=1 // pred_check
      _
    $region27: #{tpu_custom_call.1} parent=1 // pred_check_branch
      %47 = sbr.rel (0) target = $region29
    $region28: #{tpu_custom_call.1} parent=1 // pred_region
      _
    $region29: #{tpu_custom_call.1} parent=1 // pred_fallthru
      _
    // Predicated region
    $region30: #{tpu_custom_call.1} parent=1 // pred_check
      _
    $region31: #{tpu_custom_call.1} parent=1 // pred_check_branch
      %49 = sbr.rel (0) target = $region33
    $region32: #{tpu_custom_call.1} parent=1 // pred_region
      %51 = dma.done [#allocation3], 128
    $region33: #{tpu_custom_call.1} parent=1 // pred_fallthru
      _
    // Predicated region
    $region34: #{tpu_custom_call.1} parent=1 // pred_check
      _
    $region35: #{tpu_custom_call.1} parent=1 // pred_check_branch
      %53 = sbr.rel (0) target = $region37
    $region36: #{tpu_custom_call.1} parent=1 // pred_region
      %55 = dma.done [#allocation5], 256
    $region37: #{tpu_custom_call.1} parent=1 // pred_fallthru
      _
    %v56 = vld [vmem:[#allocation2] sm:$0xff]
    %v57 = vld [vmem:[#allocation4] sm:$0xff]
    %v58 = vld [vmem:[#allocation4 + $0x8] sm:$0xff]
    %v59 = vld [vmem:[%s2] sm:$0x1]
    %v61 = vperm.slane %v59, 0
    %vm63 = vcmask 130048
    %v65 = vsel %vm63, %v56, 0
    %67 = vmatpush.msra.mxu0 0.0
    %68 = vmatpush.msra.mxu0 0.0
    %69 = vmatpush.msra.mxu0 0.0
    %70 = vmatpush.msra.mxu0 0.0
    %71 = vmatpush.msra.mxu0 0.0
    %72 = vmatpush.msra.mxu0 0.0
    %73 = vmatpush.msra.mxu0 0.0
    %74 = vmatpush.msra.mxu0 0.0
    %75 = vmatpush.msra.mxu0 0.0
    %76 = vmatpush.msra.mxu0 0.0
    %77 = vmatpush.msra.mxu0 0.0
    %78 = vmatpush.msra.mxu0 0.0
    %79 = vmatpush.msra.mxu0 0.0
    %80 = vmatpush.msra.mxu0 0.0
    %81 = vmatpush.msra.mxu0 %v58
    %82 = vmatpush.msra.mxu0 %v57
    %83 = vmatmul.f32.gmra.mxu0 %v65
    %v84 = vpop.f32.mrf.mxu0
    %v85 = vadd.f32 %v61, %v84
    %86 = vdwg.mxu0
    %v87 = vmax.f32 %v85, 0.0
    %v88 = vld [vmem:[%s3] sm:$0xff]
    %v89 = vld [vmem:[%s3 + $0x8] sm:$0xff]
    %v90 = vld [vmem:[%s3 + $0x10] sm:$0xff]
    %v91 = vld [vmem:[%s3 + $0x18] sm:$0xff]
    %v92 = vld [vmem:[%s3 + $0x20] sm:$0xff]
    %v93 = vld [vmem:[%s3 + $0x28] sm:$0xff]
    %v94 = vld [vmem:[%s3 + $0x30] sm:$0xff]
    %v95 = vld [vmem:[%s3 + $0x38] sm:$0xff]
    %v96 = vld [vmem:[%s4] sm:$0x1]
    %v98 = vperm.slane %v96, 0
    %vm100 = vcmask 523264
    %v102 = vsel %vm100, %v87, 0
    %104 = vmatpush.msra.mxu0 0.0
    %105 = vmatpush.msra.mxu0 0.0
    %106 = vmatpush.msra.mxu0 0.0
    %107 = vmatpush.msra.mxu0 0.0
    %108 = vmatpush.msra.mxu0 0.0
    %109 = vmatpush.msra.mxu0 0.0
    %110 = vmatpush.msra.mxu0 0.0
    %111 = vmatpush.msra.mxu0 0.0
    %112 = vmatpush.msra.mxu0 %v95
    %113 = vmatpush.msra.mxu0 %v94
    %114 = vmatpush.msra.mxu0 %v93
    %115 = vmatpush.msra.mxu0 %v92
    %116 = vmatpush.msra.mxu0 %v91
    %117 = vmatpush.msra.mxu0 %v90
    %118 = vmatpush.msra.mxu0 %v89
    %119 = vmatpush.msra.mxu0 %v88
    %120 = vmatmul.f32.gmra.mxu0 %v102
    %v121 = vpop.f32.mrf.mxu0
    %v122 = vadd.f32 %v98, %v121
    %123 = vdwg.mxu0
    %v124 = vmax.f32 %v122, 0.0
    %v125 = vld [vmem:[%s5] sm:$0xff]
    %v126 = vld [vmem:[%s5 + $0x8] sm:$0xff]
    %v127 = vld [vmem:[%s5 + $0x10] sm:$0xff]
    %v128 = vld [vmem:[%s5 + $0x18] sm:$0xff]
    %v129 = vld [vmem:[%s5 + $0x20] sm:$0xff]
    %v130 = vld [vmem:[%s5 + $0x28] sm:$0xff]
    %v131 = vld [vmem:[%s5 + $0x30] sm:$0xff]
    %v132 = vld [vmem:[%s5 + $0x38] sm:$0xff]
    %v133 = vld [vmem:[%s6] sm:$0x1]
    %v135 = vperm.slane %v133, 0
    %v138 = vsel %vm100, %v124, 0
    %140 = vmatpush.msra.mxu0 0.0
    %141 = vmatpush.msra.mxu0 0.0
    %142 = vmatpush.msra.mxu0 0.0
    %143 = vmatpush.msra.mxu0 0.0
    %144 = vmatpush.msra.mxu0 0.0
    %145 = vmatpush.msra.mxu0 0.0
    %146 = vmatpush.msra.mxu0 0.0
    %147 = vmatpush.msra.mxu0 0.0
    %148 = vmatpush.msra.mxu0 %v132
    %149 = vmatpush.msra.mxu0 %v131
    %150 = vmatpush.msra.mxu0 %v130
    %151 = vmatpush.msra.mxu0 %v129
    %152 = vmatpush.msra.mxu0 %v128
    %153 = vmatpush.msra.mxu0 %v127
    %154 = vmatpush.msra.mxu0 %v126
    %155 = vmatpush.msra.mxu0 %v125
    %156 = vmatmul.f32.gmra.mxu0 %v138
    %v157 = vpop.f32.mrf.mxu0
    %v158 = vadd.f32 %v135, %v157
    %159 = vdwg.mxu0
    %vm160 = vcmask 31744
    %161 = vst.msk [vmem:[%s7] sm:$0xff] %vm160, %v158
    // Predicated region
    $region38: #{tpu_custom_call.1} parent=1 // pred_check
      _
    $region39: #{tpu_custom_call.1} parent=1 // pred_check_branch
      %163 = sbr.rel (0) target = $region41
    $region40: #{tpu_custom_call.1} parent=1 // pred_region
      _
    $region41: #{tpu_custom_call.1} parent=1 // pred_fallthru
      _
    // Predicated region
    $region42: #{tpu_custom_call.1} parent=1 // pred_check
      _
    $region43: #{tpu_custom_call.1} parent=1 // pred_check_branch
      %165 = sbr.rel (0) target = $region45
    $region44: #{tpu_custom_call.1} parent=1 // pred_region
      _
    $region45: #{tpu_custom_call.1} parent=1 // pred_fallthru
      _
    %166 = vsyncpa [#allocation3], 1
    %167 = vsyncpa [#allocation5], 1

</llo_original>
